<compile_context>
chip_gen: v6e
topology: v6e:2x2x1
jax: 0.10.0
libtpu: 0.0.40
codegen_flags: <defaults>
</compile_context>

<pallas_src>
import functools

import jax
import jax.numpy as jnp
from jax.experimental import pallas as pl
from jax.experimental.pallas import tpu as pltpu


@functools.lru_cache(maxsize=None)
def _roll_is_numpy_convention() -> bool:
    """True iff pltpu.roll(x, s, axis) matches jnp.roll (out[p] = x[(p - s) % n]).

    Probed with a tiny kernel so the lane-shift helpers below stay correct even if
    the rotation convention of the lowering differs from the reference impl.
    """
    def probe(x_ref, o_ref):
        o_ref[...] = pltpu.roll(x_ref[...], 1, 1)

    x = jnp.tile(jnp.arange(128, dtype=jnp.float32)[None, :], (8, 1))
    y = pl.pallas_call(probe, out_shape=jax.ShapeDtypeStruct((8, 128), jnp.float32))(x)
    return bool(y[0, 1] == 0.0)


def _fim_kernel(ker_ref, f_ref, o_ref, *, k, wp, l_pad, roll_is_numpy):
    """One (batch, C-tile) grid step.

    ker_ref : (1, k*k, L_pad)  raw Mres on the (Hp, Wp)-flattened canvas (ReLU here)
    f_ref   : (1, C_T, L_pad)  zero-padded feature map, spatial flattened, stride wp
    o_ref   : (1, C_T, L_pad)  output on the same flattened canvas
    """

    def shift_left(x, s):
        # out[..., p] = x[..., (p + s) % l_pad]
        if s == 0:
            return x
        amt = (l_pad - s) % l_pad if roll_is_numpy else s
        return pltpu.roll(x, amt, x.ndim - 1)

    def shift_right(x, s):
        # out[..., p] = x[..., (p - s) % l_pad]
        if s == 0:
            return x
        amt = s if roll_is_numpy else (l_pad - s) % l_pad
        return pltpu.roll(x, amt, x.ndim - 1)

    f_nat = f_ref[0]                                        # (C_T, L_pad), native dtype
    # 8 column-shifted feature planes, built once (7 big XLU rolls).  Rolls stay in
    # the input dtype (bf16 stays packed); promotion to f32 happens at the multiply.
    fjs = [shift_left(f_nat, j) for j in range(k)]

    # TODO(synk): for very large C tiles, wrap the loop below in a fori_loop over
    #             8-row channel sub-tiles so a_i / acc stay vreg-resident.
    acc = None
    for i in range(k):
        # Bulk ReLU of the 8 taps of kernel row i (one aligned 8-sublane slice), then
        # one small (8, L_pad) roll moves them onto the row-i canvas.  Wrapped lanes
        # only ever land on invalid output positions (sliced away wrapper-side).
        taps = jnp.maximum(ker_ref[0, i * k:(i + 1) * k, :], 0.0).astype(jnp.float32)
        taps = shift_right(taps, i * wp)
        a_i = taps[0:1, :] * fjs[0]
        for j in range(1, k):
            a_i = a_i + taps[j:j + 1, :] * fjs[j]           # (C_T, L_pad) f32 VPU FMA
        a_i = shift_left(a_i, i * wp)                       # realign: 1 big XLU roll
        acc = a_i if acc is None else acc + a_i
    o_ref[0] = acc.astype(o_ref.dtype)


def _vmem_capacity_bytes():
    """Per-core VMEM capacity; conservative (v7x) fallback if the query fails."""
    try:
        cap = getattr(pltpu.get_tpu_info(), "vmem_capacity_bytes", None)
        if cap:
            return int(cap)
    except Exception:
        pass
    return 64 * 2**20


def _estimate_vmem_bytes(c_tile, l_pad, kk, k, ker_bytes, fm_bytes):
    # Double-buffered pipeline blocks (Mres, feature-map in, output out).
    blocks = l_pad * 2 * (kk * ker_bytes + c_tile * fm_bytes + c_tile * fm_bytes)
    # In-kernel temporaries: k column-shifted feature planes (native dtype), the f32
    # row partial + its realigned copy + the f32 accumulator, and the f32 tap rows.
    temps = l_pad * (k * c_tile * fm_bytes + 3 * c_tile * 4 + 2 * k * 4)
    return blocks + temps


def _pick_c_tile(B, C, l_pad, kk, k, ker_bytes, fm_bytes, budget_bytes):
    """Largest channel tile (multiple of 8 dividing C, or all of C) fitting the VMEM
    budget; split further if needed so the parallel grid has >= 2 steps (v7x)."""
    cands = sorted({t for t in range(8, C + 1, 8) if C % t == 0} | {C}, reverse=True)
    c_tile = cands[-1]
    for ct in cands:
        if _estimate_vmem_bytes(ct, l_pad, kk, k, ker_bytes, fm_bytes) <= budget_bytes:
            c_tile = ct
            break
    # Megacore occupancy: harmless single extra grid step on 1-TC parts.
    if B * (C // c_tile) < 2:
        smaller = [t for t in cands if t < c_tile]
        if smaller:
            c_tile = smaller[0]
    return c_tile, _estimate_vmem_bytes(c_tile, l_pad, kk, k, ker_bytes, fm_bytes)


def fim_forward(mres_features, feature_map, *, k=8):
    B, C, H, W = feature_map.shape
    kk = k * k
    assert mres_features.shape == (B, kk, H, W), "Mres_features must have k*k channels"

    pad_lo, pad_hi = (k - 1) // 2, k // 2            # (3, 4) for k=8 == F.pad(fm,(3,4,3,4))
    hp, wp = H + k - 1, W + k - 1
    l_flat = hp * wp
    l_pad = ((l_flat + 127) // 128) * 128            # lane-dense flattened spatial length

    # No-wrap guarantee for the lane rotations: the largest flat index any valid
    # output position reads is (hp-1)*wp + (wp-1) = l_flat - 1 < l_pad.
    assert (H - 1 + k - 1) * wp + (W - 1 + k - 1) < l_pad

    # Glue (XLA pad+reshape): flatten the padded spatial plane with stride wp and pad
    # the lane axis up to a multiple of 128.
    # TODO(synk): the (3,4) halo + lane padding could be folded into the kernel (or
    #             fused via allow_input_fusion) to avoid this extra HBM pass.
    fpad = jnp.pad(feature_map, ((0, 0), (0, 0), (pad_lo, pad_hi), (pad_lo, pad_hi)))
    f_flat = jnp.pad(fpad.reshape(B, C, l_flat), ((0, 0), (0, 0), (0, l_pad - l_flat)))
    # Mres tap for output pixel (h, w) must sit at flat index h*wp + w -> pad bottom/right.
    kpad = jnp.pad(mres_features, ((0, 0), (0, 0), (0, k - 1), (0, k - 1)))
    k_flat = jnp.pad(kpad.reshape(B, kk, l_flat), ((0, 0), (0, 0), (0, l_pad - l_flat)))

    vmem_cap = _vmem_capacity_bytes()
    c_tile, vmem_est = _pick_c_tile(
        B, C, l_pad, kk, k,
        mres_features.dtype.itemsize, feature_map.dtype.itemsize,
        budget_bytes=int(0.70 * vmem_cap))
    vmem_limit = int(min(max(int(1.25 * vmem_est), 32 * 2**20), int(0.85 * vmem_cap)))

    kernel = functools.partial(
        _fim_kernel, k=k, wp=wp, l_pad=l_pad,
        roll_is_numpy=_roll_is_numpy_convention())

    out_flat = pl.pallas_call(
        kernel,
        out_shape=jax.ShapeDtypeStruct((B, C, l_pad), feature_map.dtype),
        grid=(B, C // c_tile),
        in_specs=[
            # Mres block ignores the C-tile axis -> stays resident across C tiles.
            # TODO(synk): pipeline_mode=pl.Buffered(1) would drop its second buffer.
            pl.BlockSpec((1, kk, l_pad), lambda b, c: (b, 0, 0)),
            pl.BlockSpec((1, c_tile, l_pad), lambda b, c: (b, c, 0)),
        ],
        out_specs=pl.BlockSpec((1, c_tile, l_pad), lambda b, c: (b, c, 0)),
        compiler_params=pltpu.CompilerParams(
            dimension_semantics=("parallel", "parallel"),
            vmem_limit_bytes=vmem_limit,
        ),
    )(k_flat, f_flat)

    # Undo the flattening: keep only the valid (H, W) window of the padded canvas.
    return out_flat[:, :, :l_flat].reshape(B, C, hp, wp)[:, :, :H, :W]


def fim_reference(mres_features, feature_map, *, k=8):
    """Pure-JAX reference (mirrors the PyTorch unfold formulation)."""
    B, C, H, W = feature_map.shape
    pad_lo, pad_hi = (k - 1) // 2, k // 2
    T = jax.nn.relu(mres_features).astype(jnp.float32)      # (B, k*k, H, W)
    fpad = jnp.pad(feature_map, ((0, 0), (0, 0), (pad_lo, pad_hi), (pad_lo, pad_hi)))
    fpad = fpad.astype(jnp.float32)
    out = jnp.zeros((B, C, H, W), jnp.float32)
    for i in range(k):
        for j in range(k):
            out = out + T[:, i * k + j][:, None, :, :] * fpad[:, :, i:i + H, j:j + W]
    return out.astype(feature_map.dtype)


if __name__ == "__main__":
    B, C, H, W, K = 2, 4, 16, 16, 8

    key = jax.random.PRNGKey(0)
    k1, k2 = jax.random.split(key)
    mres = jax.random.normal(k1, (B, K * K, H, W), dtype=jnp.float32)
    fmap = jax.random.normal(k2, (B, C, H, W), dtype=jnp.float32)

    out = jax.block_until_ready(fim_forward(mres, fmap, k=K))
    ref = fim_reference(mres, fmap, k=K)

    assert out.shape == (B, C, H, W)
    max_err = float(jnp.max(jnp.abs(out - ref)))
    assert jnp.allclose(out, ref, atol=1e-4, rtol=1e-4), max_err
    print("KERNEL_OK")
</pallas_src>

<mosaic_0001>
module attributes {stable_mosaic.version = 11 : i64} {
  func.func @probe(%arg0: memref<8x128xf32, #tpu.memory_space<vmem>>, %arg1: memref<8x128xf32, #tpu.memory_space<vmem>>) attributes {dimension_semantics = [], scalar_prefetch = 0 : i64, scratch_operands = 0 : i64, tpu.core_type = #tpu.core_type<tc>} {
    %c0 = arith.constant 0 : index
    %c0_0 = arith.constant 0 : index
    %0 = vector.load %arg0[%c0, %c0_0] : memref<8x128xf32, #tpu.memory_space<vmem>>, vector<8x128xf32>
    %c1_i32 = arith.constant 1 : i32
    %1 = tpu.dynamic_rotate %0 by %c1_i32 dim 1 : vector<8x128xf32>, i32 -> vector<8x128xf32>
    %c0_1 = arith.constant 0 : index
    %c0_2 = arith.constant 0 : index
    %2 = vector.load %arg1[%c0_1, %c0_2] : memref<8x128xf32, #tpu.memory_space<vmem>>, vector<8x128xf32>
    tpu.vector_store %arg1[%c0_1, %c0_2], %1 {strides = array<i32>} : memref<8x128xf32, #tpu.memory_space<vmem>>, vector<8x128xf32>,
    return
  }
}

</mosaic_0001>

<llo_original>
// kernel: tpu_custom_call.1
$region0: #{tpu_custom_call.1}
  #allocation0 [shape = 'u32[]', space=smem, size = 0x4, offset = 0x4, fixed_abs, tag = 'smem constant byte address 0x4 - core index']
  #allocation1 [shape = 'u32[144,128]{1,0:T(1,128)}', space=vmem, size = 0x12000, scoped, tag = 'internal scratch']
  %s0 = inlined_call_operand.hbm [shape: f32[8,128], index: 0, kind: input, shape index: {}]
  %s1 = inlined_call_operand.hbm [shape: f32[8,128], index: 1, kind: output, shape index: {}]
  %s2 = sld [smem:[#allocation0]]
  $region18: #{tpu_custom_call.1} parent=0
    _
  %s4 = ssub.s32 1, %s2
  %s5 = scalar_select 0, %s4, %s2
  $region1: #{tpu_custom_call.1} parent=0
    #allocation2 [shape = 'u8[4096]{0}', space=vmem, size = 0x1000, scoped, tag = 'input window, operand 0, single buffered']
    #allocation3 [shape = 's32[1]{0}', space=sflag, size = 0x4, scoped, tag = 'scoped memory for tpu_custom_call.1']
    #allocation4 [shape = 's32[1]{0}', space=sflag, size = 0x4, scoped, tag = 'scoped memory for tpu_custom_call.1']
    #allocation5 [shape = 'u8[4096]{0}', space=vmem, size = 0x1000, scoped, tag = 'output window, operand 0, single buffered']
    %6 = vsyncpa [#allocation3], 0
    %7 = vsyncpa [#allocation4], 0
    // Predicated region
    $region2: #{tpu_custom_call.1} parent=1 // pred_check
      _
    $region3: #{tpu_custom_call.1} parent=1 // pred_check_branch
      %9 = sbr.rel (0) target = $region5
    $region4: #{tpu_custom_call.1} parent=1 // pred_region
      %s11 = ssub.s32 128, 128
      %12 = vsyncadd [#allocation3], %s11
      %s14 = sshll.u32 [#allocation2], 4
      %s15 = int_to_ptr.vmem [resolvable:$true] %s14
      %17 = dma.hbm_to_vmem [thread:$0]  %s0, 128, %s15, [#allocation3]
    $region5: #{tpu_custom_call.1} parent=1 // pred_fallthru
      _
    // Predicated region
    $region6: #{tpu_custom_call.1} parent=1 // pred_check
      _
    $region7: #{tpu_custom_call.1} parent=1 // pred_check_branch
      %19 = sbr.rel (0) target = $region9
    $region8: #{tpu_custom_call.1} parent=1 // pred_region
      %20 = dma.done [#allocation3], 128
    $region9: #{tpu_custom_call.1} parent=1 // pred_fallthru
      _
    %v21 = vld [vmem:[#allocation2] sm:$0xff]
    %22 = vrot.lane.b32.xlu0 %v21, 1
    %v23 = vpop.permute.xlu0 %22
    %24 = vst [vmem:[#allocation5] sm:$0xff] %v23
    // Predicated region
    $region10: #{tpu_custom_call.1} parent=1 // pred_check
      _
    $region11: #{tpu_custom_call.1} parent=1 // pred_check_branch
      %26 = sbr.rel (0) target = $region13
    $region12: #{tpu_custom_call.1} parent=1 // pred_region
      %s28 = ssub.s32 128, 128
      %29 = vsyncadd [#allocation4], %s28
      %s31 = sshll.u32 [#allocation5], 4
      %s32 = int_to_ptr.vmem [resolvable:$true] %s31
      %34 = dma.vmem_to_hbm [thread:$0]  %s32, 128, %s1, [#allocation4]
    $region13: #{tpu_custom_call.1} parent=1 // pred_fallthru
      _
    // Predicated region
    $region14: #{tpu_custom_call.1} parent=1 // pred_check
      _
    $region15: #{tpu_custom_call.1} parent=1 // pred_check_branch
      %36 = sbr.rel (0) target = $region17
    $region16: #{tpu_custom_call.1} parent=1 // pred_region
      %37 = dma.done [#allocation4], 128
    $region17: #{tpu_custom_call.1} parent=1 // pred_fallthru
      _
    %38 = vsyncpa [#allocation3], 1
    %39 = vsyncpa [#allocation4], 1

</llo_original>
